<compile_context>
chip_gen: v7x
topology: tpu7x:2x2x1
jax: 0.10.0
libtpu: 0.0.40
codegen_flags: <defaults>
</compile_context>

<pallas_src>
import jax
import jax.numpy as jnp
from jax.experimental import pallas as pl
from jax.experimental.pallas import tpu as pltpu


# ----------------------------------------------------------------------------
# Kernel
# ----------------------------------------------------------------------------
def _gcn4_kernel(space_ref, time_ref, src_ref, ws_ref, wt_ref, wsrc_ref,
                 b_ref, out_ref):
    # space_ref : (TB, N, D)  compute dtype (bf16 or f32)
    # time_ref  : (TB, D)     src_ref: (TB, D)
    # ws/wt/wsrc: (D, O)      resident weights (constant block index)
    # b_ref     : (1, O) f32  (b_space + b_time folded)
    # out_ref   : (TB, O) f32
    cdt = ws_ref.dtype

    # Cheap sublane reduction over the neighbor axis, in f32 (v5e VPU has no
    # bf16 path), then back to the MXU dtype.  Pre-summing keeps MXU work at
    # one row per batch item instead of N.
    space_sum = jnp.sum(space_ref[...].astype(jnp.float32), axis=1).astype(cdt)

    acc = jnp.dot(space_sum, ws_ref[...], preferred_element_type=jnp.float32)
    acc = acc + jnp.dot(time_ref[...], wt_ref[...],
                        preferred_element_type=jnp.float32)
    acc = acc + jnp.dot(src_ref[...], wsrc_ref[...],
                        preferred_element_type=jnp.float32)

    out_ref[...] = (acc + b_ref[...]).astype(out_ref.dtype)


# ----------------------------------------------------------------------------
# Parameter preparation (run ONCE, e.g. at module init)
# ----------------------------------------------------------------------------
def make_gcn4_params(w_space, w_time, w_src, b_space=None, b_time=None,
                     *, compute_dtype=jnp.bfloat16):
    """Cast weights to the compute dtype and fold the two biases (f32)."""
    D, O = w_space.shape
    if b_space is None:
        b_space = jnp.zeros((O,), jnp.float32)
    if b_time is None:
        b_time = jnp.zeros((O,), jnp.float32)
    bias = (jnp.reshape(b_space, (1, O)).astype(jnp.float32)
            + jnp.reshape(b_time, (1, O)).astype(jnp.float32))
    return (w_space.astype(compute_dtype),
            w_time.astype(compute_dtype),
            w_src.astype(compute_dtype),
            bias)


def _pick_tile(B, bytes_per_row, resident_bytes):
    """Large tiles to amortize ~0.35us/step overhead, but keep >= ~8 grid
    steps when the batch allows (v7x megacore wants >=2 per TC with overlap)
    and keep the double-buffered working set well inside v7x's 64 MiB VMEM."""
    tb = max(8, min(1024, B // 8))
    tb = max(8, (tb // 8) * 8)
    budget = 40 * 1024 * 1024
    while tb > 8 and (2 * tb * bytes_per_row + 2 * resident_bytes) > budget:
        tb = max(8, (tb // 2 // 8) * 8)
    return tb


# ----------------------------------------------------------------------------
# Batched forward: B independent GCN4 node evaluations in one pallas_call
# ----------------------------------------------------------------------------
def gcn4_forward_batched(input_space, input_time, src_feature, params, *,
                         tb=None):
    """input_space: (B, N, D)  input_time/src_feature: (B, D)  -> (B, O) f32."""
    w_space, w_time, w_src, bias = params
    B, N, D = input_space.shape
    O = w_space.shape[1]
    cdt = w_space.dtype
    itemsize = jnp.dtype(cdt).itemsize

    bytes_per_row = (N + 2) * D * itemsize + O * 4          # inputs + output
    resident = 3 * D * O * itemsize + O * 4                  # weights + bias

    if tb is None:
        tb = _pick_tile(B, bytes_per_row, resident)
    tb = max(8, (int(tb) // 8) * 8)                          # sublane-aligned

    grid_b = pl.cdiv(B, tb)
    Bp = grid_b * tb
    if Bp != B:                                              # ragged batch: pad
        pad = Bp - B
        input_space = jnp.pad(input_space, ((0, pad), (0, 0), (0, 0)))
        input_time = jnp.pad(input_time, ((0, pad), (0, 0)))
        src_feature = jnp.pad(src_feature, ((0, pad), (0, 0)))

    # bf16 (or f32) at the pallas_call boundary: halves input_space HBM traffic.
    input_space = input_space.astype(cdt)
    input_time = input_time.astype(cdt)
    src_feature = src_feature.astype(cdt)

    # Explicit scoped-VMEM limit sized from the tile math (double-buffered
    # inputs/outputs + resident weights), capped below v7x physical VMEM.
    vmem_needed = 2 * tb * bytes_per_row + 2 * resident
    vmem_limit = int(min(64 * 1024 * 1024,
                         max(32 * 1024 * 1024, vmem_needed + 4 * 1024 * 1024)))

    out = pl.pallas_call(
        _gcn4_kernel,
        out_shape=jax.ShapeDtypeStruct((Bp, O), jnp.float32),
        grid=(grid_b,),
        in_specs=[
            pl.BlockSpec((tb, N, D), lambda i: (i, 0, 0)),   # neighbor features
            pl.BlockSpec((tb, D), lambda i: (i, 0)),         # time features
            pl.BlockSpec((tb, D), lambda i: (i, 0)),         # src features
            pl.BlockSpec((D, O), lambda i: (0, 0)),          # W_space (resident)
            pl.BlockSpec((D, O), lambda i: (0, 0)),          # W_time  (resident)
            pl.BlockSpec((D, O), lambda i: (0, 0)),          # W_src   (resident)
            pl.BlockSpec((1, O), lambda i: (0, 0)),          # fused bias (resident)
        ],
        out_specs=pl.BlockSpec((tb, O), lambda i: (i, 0)),   # lane-dense output slab
        compiler_params=pltpu.CompilerParams(
            dimension_semantics=("parallel",),               # 2nd TC on v7x
            vmem_limit_bytes=vmem_limit),
    )(input_space, input_time, src_feature, w_space, w_time, w_src, bias)

    return out[:B] if Bp != B else out


# ----------------------------------------------------------------------------
# Original single-node forward (compatibility shim — batch at call sites!)
# ----------------------------------------------------------------------------
def gcn4_forward(input_space, input_time, src_feature,
                 w_space, w_time, w_src, b_space=None, b_time=None,
                 *, compute_dtype=jnp.float32):
    """input_space: (N, D)  input_time/src_feature: (1, D)  -> (1, O)."""
    N, D = input_space.shape
    params = make_gcn4_params(w_space, w_time, w_src, b_space, b_time,
                              compute_dtype=compute_dtype)
    return gcn4_forward_batched(
        input_space.reshape(1, N, D),
        input_time.reshape(1, D),
        src_feature.reshape(1, D),
        params, tb=8)


# ----------------------------------------------------------------------------
# Pure-JAX reference (mirrors the PyTorch forward, single node)
# ----------------------------------------------------------------------------
def reference_forward(input_space, input_time, src_feature,
                      w_space, w_time, w_src, b_space, b_time):
    space = (input_space @ w_space).sum(axis=0) + jnp.reshape(b_space, (-1,))
    time = (input_time @ w_time).sum(axis=0) + jnp.reshape(b_time, (-1,))
    src = src_feature @ w_src
    return space + time + src  # broadcasts to (1, O)


if __name__ == "__main__":
    key = jax.random.PRNGKey(0)
    # Small shapes consistent with the module: batch of nodes, neighbors,
    # input_dim, output_dim.
    B, N, D, O = 32, 8, 32, 32

    ks = jax.random.split(key, 8)
    input_space = jax.random.normal(ks[0], (B, N, D), jnp.float32)
    input_time = jax.random.normal(ks[1], (B, D), jnp.float32)
    src_feature = jax.random.normal(ks[2], (B, D), jnp.float32)

    # reset_parameters(): uniform(0.1, 0.2) weights; biases are zero at init —
    # use small random biases to exercise the fused-bias path.
    w_space = jax.random.uniform(ks[3], (D, O), jnp.float32, 0.1, 0.2)
    w_time = jax.random.uniform(ks[4], (D, O), jnp.float32, 0.1, 0.2)
    w_src = jax.random.uniform(ks[5], (D, O), jnp.float32, 0.1, 0.2)
    b_space = jax.random.uniform(ks[6], (O,), jnp.float32, -0.1, 0.1)
    b_time = jax.random.uniform(ks[7], (O,), jnp.float32, -0.1, 0.1)

    # --- batched path: bf16 inputs/weights, f32 accumulate -------------------
    params_bf16 = make_gcn4_params(w_space, w_time, w_src, b_space, b_time,
                                   compute_dtype=jnp.bfloat16)
    out_b = gcn4_forward_batched(input_space, input_time, src_feature,
                                 params_bf16)
    out_b = jax.block_until_ready(out_b)
    assert out_b.shape == (B, O) and out_b.dtype == jnp.float32

    # Reference with the same bf16 quantization of inputs/weights (f32 math),
    # so the comparison isolates kernel correctness from the deliberate cast.
    def q(x):
        return x.astype(jnp.bfloat16).astype(jnp.float32)

    ref_b = jax.vmap(
        lambda sp, t, s: reference_forward(q(sp), q(t)[None, :], q(s)[None, :],
                                           q(w_space), q(w_time), q(w_src),
                                           b_space, b_time)[0]
    )(input_space, input_time, src_feature)
    assert jnp.allclose(out_b, ref_b, atol=5e-2, rtol=5e-2), (
        "max abs err %f" % float(jnp.max(jnp.abs(out_b - ref_b))))

    # --- original single-node forward (f32 compat path, tight tolerance) -----
    out1 = gcn4_forward(input_space[0], input_time[0:1], src_feature[0:1],
                        w_space, w_time, w_src, b_space, b_time,
                        compute_dtype=jnp.float32)
    out1 = jax.block_until_ready(out1)
    ref1 = reference_forward(input_space[0], input_time[0:1], src_feature[0:1],
                             w_space, w_time, w_src, b_space, b_time)
    assert out1.shape == (1, O)
    assert jnp.allclose(out1, ref1, atol=1e-4, rtol=1e-4)

    print("KERNEL_OK")
</pallas_src>

<mosaic_0001>
module attributes {stable_mosaic.version = 11 : i64} {
  func.func @_gcn4_kernel(%arg0: i32, %arg1: memref<8x8x32xbf16, #tpu.memory_space<vmem>>, %arg2: memref<8x32xbf16, #tpu.memory_space<vmem>>, %arg3: memref<8x32xbf16, #tpu.memory_space<vmem>>, %arg4: memref<32x32xbf16, #tpu.memory_space<vmem>>, %arg5: memref<32x32xbf16, #tpu.memory_space<vmem>>, %arg6: memref<32x32xbf16, #tpu.memory_space<vmem>>, %arg7: memref<1x32xf32, #tpu.memory_space<vmem>>, %arg8: memref<8x32xf32, #tpu.memory_space<vmem>>) attributes {dimension_semantics = [#tpu.dimension_semantics<parallel>], iteration_bounds = array<i64: 4>, scalar_prefetch = 0 : i64, scratch_operands = 0 : i64, tpu.core_type = #tpu.core_type<tc>, window_params = [{transform_indices = @transform_0, window_bounds = array<i64: 8, 8, 32>}, {transform_indices = @transform_1, window_bounds = array<i64: 8, 32>}, {transform_indices = @transform_2, window_bounds = array<i64: 8, 32>}, {pipeline_mode = #tpu.pipeline_mode<synchronous>, transform_indices = @transform_3, window_bounds = array<i64: 32, 32>}, {pipeline_mode = #tpu.pipeline_mode<synchronous>, transform_indices = @transform_4, window_bounds = array<i64: 32, 32>}, {pipeline_mode = #tpu.pipeline_mode<synchronous>, transform_indices = @transform_5, window_bounds = array<i64: 32, 32>}, {pipeline_mode = #tpu.pipeline_mode<synchronous>, transform_indices = @transform_6, window_bounds = array<i64: 1, 32>}, {transform_indices = @transform_7, window_bounds = array<i64: 8, 32>}]} {
    %c0 = arith.constant 0 : index
    %c0_0 = arith.constant 0 : index
    %c0_1 = arith.constant 0 : index
    %0 = vector.load %arg1[%c0, %c0_0, %c0_1] : memref<8x8x32xbf16, #tpu.memory_space<vmem>>, vector<8x8x32xbf16>
    %1 = arith.extf %0 : vector<8x8x32xbf16> to vector<8x8x32xf32>
    %cst = arith.constant dense<0.000000e+00> : vector<8x32xf32>
    %2 = vector.multi_reduction <add>, %1, %cst [1] : vector<8x8x32xf32> to vector<8x32xf32>
    %3 = arith.truncf %2 : vector<8x32xf32> to vector<8x32xbf16>
    %c0_2 = arith.constant 0 : index
    %c0_3 = arith.constant 0 : index
    %4 = vector.load %arg4[%c0_2, %c0_3] : memref<32x32xbf16, #tpu.memory_space<vmem>>, vector<32x32xbf16>
    %cst_4 = arith.constant dense<0.000000e+00> : vector<8x32xf32>
    %5 = tpu.matmul %3, %4, %cst_4 {dimension_numbers = #tpu.dot_dimension_numbers<[1], [0], [0], [1], [0, 0, 1, 1], [], []>} : vector<8x32xbf16>, vector<32x32xbf16>, vector<8x32xf32> -> vector<8x32xf32>
    %c0_5 = arith.constant 0 : index
    %c0_6 = arith.constant 0 : index
    %6 = vector.load %arg2[%c0_5, %c0_6] : memref<8x32xbf16, #tpu.memory_space<vmem>>, vector<8x32xbf16>
    %c0_7 = arith.constant 0 : index
    %c0_8 = arith.constant 0 : index
    %7 = vector.load %arg5[%c0_7, %c0_8] : memref<32x32xbf16, #tpu.memory_space<vmem>>, vector<32x32xbf16>
    %cst_9 = arith.constant dense<0.000000e+00> : vector<8x32xf32>
    %8 = tpu.matmul %6, %7, %cst_9 {dimension_numbers = #tpu.dot_dimension_numbers<[1], [0], [0], [1], [0, 0, 1, 1], [], []>} : vector<8x32xbf16>, vector<32x32xbf16>, vector<8x32xf32> -> vector<8x32xf32>
    %9 = arith.addf %5, %8 : vector<8x32xf32>
    %c0_10 = arith.constant 0 : index
    %c0_11 = arith.constant 0 : index
    %10 = vector.load %arg3[%c0_10, %c0_11] : memref<8x32xbf16, #tpu.memory_space<vmem>>, vector<8x32xbf16>
    %c0_12 = arith.constant 0 : index
    %c0_13 = arith.constant 0 : index
    %11 = vector.load %arg6[%c0_12, %c0_13] : memref<32x32xbf16, #tpu.memory_space<vmem>>, vector<32x32xbf16>
    %cst_14 = arith.constant dense<0.000000e+00> : vector<8x32xf32>
    %12 = tpu.matmul %10, %11, %cst_14 {dimension_numbers = #tpu.dot_dimension_numbers<[1], [0], [0], [1], [0, 0, 1, 1], [], []>} : vector<8x32xbf16>, vector<32x32xbf16>, vector<8x32xf32> -> vector<8x32xf32>
    %13 = arith.addf %9, %12 : vector<8x32xf32>
    %c0_15 = arith.constant 0 : index
    %c0_16 = arith.constant 0 : index
    %14 = vector.load %arg7[%c0_15, %c0_16] : memref<1x32xf32, #tpu.memory_space<vmem>>, vector<1x32xf32>
    %15 = vector.broadcast %14 : vector<1x32xf32> to vector<8x32xf32>
    %16 = arith.addf %13, %15 : vector<8x32xf32>
    %c0_17 = arith.constant 0 : index
    %c0_18 = arith.constant 0 : index
    %17 = vector.load %arg8[%c0_17, %c0_18] : memref<8x32xf32, #tpu.memory_space<vmem>>, vector<8x32xf32>
    tpu.vector_store %arg8[%c0_17, %c0_18], %16 {strides = array<i32>} : memref<8x32xf32, #tpu.memory_space<vmem>>, vector<8x32xf32>,
    return
  }
  func.func @transform_0(%arg0: i32) -> (i32, i32, i32) {
    %c0_i32 = arith.constant 0 : i32
    %c0_i32_0 = arith.constant 0 : i32
    %c0_i32_1 = arith.constant 0 : i32
    return %arg0, %c0_i32, %c0_i32_0 : i32, i32, i32
  }
  func.func @transform_1(%arg0: i32) -> (i32, i32) {
    %c0_i32 = arith.constant 0 : i32
    %c0_i32_0 = arith.constant 0 : i32
    return %arg0, %c0_i32 : i32, i32
  }
  func.func @transform_2(%arg0: i32) -> (i32, i32) {
    %c0_i32 = arith.constant 0 : i32
    %c0_i32_0 = arith.constant 0 : i32
    return %arg0, %c0_i32 : i32, i32
  }
  func.func @transform_3(%arg0: i32) -> (i32, i32) {
    %c0_i32 = arith.constant 0 : i32
    %c0_i32_0 = arith.constant 0 : i32
    %c0_i32_1 = arith.constant 0 : i32
    return %c0_i32, %c0_i32_0 : i32, i32
  }
  func.func @transform_4(%arg0: i32) -> (i32, i32) {
    %c0_i32 = arith.constant 0 : i32
    %c0_i32_0 = arith.constant 0 : i32
    %c0_i32_1 = arith.constant 0 : i32
    return %c0_i32, %c0_i32_0 : i32, i32
  }
  func.func @transform_5(%arg0: i32) -> (i32, i32) {
    %c0_i32 = arith.constant 0 : i32
    %c0_i32_0 = arith.constant 0 : i32
    %c0_i32_1 = arith.constant 0 : i32
    return %c0_i32, %c0_i32_0 : i32, i32
  }
  func.func @transform_6(%arg0: i32) -> (i32, i32) {
    %c0_i32 = arith.constant 0 : i32
    %c0_i32_0 = arith.constant 0 : i32
    %c0_i32_1 = arith.constant 0 : i32
    return %c0_i32, %c0_i32_0 : i32, i32
  }
  func.func @transform_7(%arg0: i32) -> (i32, i32) {
    %c0_i32 = arith.constant 0 : i32
    %c0_i32_0 = arith.constant 0 : i32
    return %arg0, %c0_i32 : i32, i32
  }
}

</mosaic_0001>

<llo_original>
// kernel: tpu_custom_call.1
$region0: #{tpu_custom_call.1}
  #allocation0 [shape = 'u32[]', space=smem, size = 0x4, offset = 0x4, fixed_abs, tag = 'smem constant byte address 0x4 - core index']
  #allocation1 [shape = 'u32[144,128]{1,0:T(1,128)}', space=vmem, size = 0x12000, scoped, tag = 'internal scratch']
  %s0 = inlined_call_operand.hbm [shape: bf16[32,8,32], index: 0, kind: input, shape index: {}]
  %s1 = inlined_call_operand.hbm [shape: bf16[32,32], index: 1, kind: input, shape index: {}]
  %s2 = inlined_call_operand.hbm [shape: bf16[32,32], index: 2, kind: input, shape index: {}]
  %s3 = inlined_call_operand.hbm [shape: bf16[32,32], index: 3, kind: input, shape index: {}]
  %s4 = inlined_call_operand.hbm [shape: bf16[32,32], index: 4, kind: input, shape index: {}]
  %s5 = inlined_call_operand.vmem [shape: bf16[32,32], index: 5, kind: input, shape index: {}]
  %s6 = inlined_call_operand.vmem [shape: f32[1,32], index: 6, kind: input, shape index: {}]
  %s7 = inlined_call_operand.hbm [shape: f32[32,32], index: 7, kind: output, shape index: {}]
  %s8 = sld [smem:[#allocation0]]
  $region81: #{tpu_custom_call.1} parent=0
    _
  %s10 = ssub.s32 1, %s8
  %s11 = scalar_select 0, %s10, %s8
  $region1: #{tpu_custom_call.1} parent=0
    #allocation2 [shape = 'u8[32768]{0}', space=vmem, size = 0x8000, scoped, tag = 'input window, operand 0']
    #allocation3 [shape = 's32[2]{0}', space=sflag, size = 0x8, scoped, tag = 'scoped memory for tpu_custom_call.1']
    #allocation4 [shape = 's32[2]{0}', space=sflag, size = 0x8, scoped, tag = 'scoped memory for tpu_custom_call.1']
    #allocation5 [shape = 'u8[4096]{0}', space=vmem, size = 0x1000, scoped, tag = 'input window, operand 1']
    #allocation6 [shape = 's32[2]{0}', space=sflag, size = 0x8, scoped, tag = 'scoped memory for tpu_custom_call.1']
    #allocation7 [shape = 'u8[4096]{0}', space=vmem, size = 0x1000, scoped, tag = 'input window, operand 2']
    #allocation8 [shape = 'u8[8192]{0}', space=vmem, size = 0x2000, scoped, tag = 'input window, operand 3, single buffered']
    #allocation9 [shape = 's32[1]{0}', space=sflag, size = 0x4, scoped, tag = 'scoped memory for tpu_custom_call.1']
    #allocation10 [shape = 'u8[8192]{0}', space=vmem, size = 0x2000, scoped, tag = 'input window, operand 4, single buffered']
    #allocation11 [shape = 'u8[8192]{0}', space=vmem, size = 0x2000, scoped, tag = 'output window, operand 0']
    %12 = vsyncpa [#allocation3], 0
    %s13 = scalar_lea.sflag [#allocation3], 1
    %14 = vsyncpa %s13, 0
    %15 = vsyncpa [#allocation6], 0
    %s16 = scalar_lea.sflag [#allocation6], 1
    %17 = vsyncpa %s16, 0
    %18 = vsyncpa [#allocation9], 0
    %19 = vsyncpa [#allocation4], 0
    %s20 = scalar_lea.sflag [#allocation4], 1
    %21 = vsyncpa %s20, 0
    loop: start=0, step=1, limit=6
    $region2: #{tpu_custom_call.1} parent=1 // loop_pre_header
      _
    $region3: #{tpu_custom_call.1} parent=1 // loop_header
      %s23 = sphi 0, %s27
      %p24 = scmp.ge.s32.totalorder %s23, 6
      %s33 = sphi 0, %s35
      %s36 = sphi 0, %s33
      %s37 = sphi 0, %s36
      %s53 = sphi 0, %s37
      %s59 = sphi 0, %s61
      %s62 = sphi 0, %s59
      %s63 = sphi 0, %s62
      %s79 = sphi 0, %s63
      %s85 = sphi 0, %s87
      %s88 = sphi 0, %s85
      %s89 = sphi 0, %s88
      %s105 = sphi 0, %s89
      %s109 = sphi 0, %s109
      %s111 = sphi 0, %s109
      %s112 = sphi 0, %s111
      %s126 = sphi 0, %s112
      %s130 = sphi 0, %s130
      %s132 = sphi 0, %s130
      %s133 = sphi 0, %s132
      %s147 = sphi 0, %s133
      %s151 = sphi 0, %s151
      %s153 = sphi 0, %s151
      %s154 = sphi 0, %s153
      %s168 = sphi 0, %s154
      %s172 = sphi 0, %s172
      %s174 = sphi 0, %s172
      %s175 = sphi 0, %s174
      %s189 = sphi 0, %s175
      %s195 = sphi 0, %s197
      %s198 = sphi 0, %s195
      %s199 = sphi 0, %s198
      %s215 = sphi 0, %s199
    $region4: #{tpu_custom_call.1} parent=1 // loop_header_branch
      %26 = sbr.rel (%p24) target = $region8
    $region5: #{tpu_custom_call.1} parent=1 // loop_body
      %s28 = ssub.s32 %s23, 1
      %s29 = ssub.s32 %s23, 2
      %s30 = sadd.s32 %s23, 1
      %s31 = ssub.s32 %s23, %s30
      %p32 = scmp.eq.s32.totalorder %s31, 0
      %s34 = sadd.s32 %s33, 1
      %s35 = scalar_select %p32, %s33, %s34
      %p38 = pneg %p32
      %p39 = scmp.eq.s32.totalorder %s23, 3
      %p40 = por %p38, %p39
      %p41 = scmp.ne.s32.totalorder %s33, %s36
      %p42 = scmp.eq.s32.totalorder %s23, 0
      %p43 = por %p41, %p42
      %p44 = scmp.ne.s32.totalorder %s33, %s36
      %p45 = scmp.eq.s32.totalorder %s28, 3
      %p46 = por %p44, %p45
      %p47 = scmp.ne.s32.totalorder %s36, %s37
      %p48 = scmp.eq.s32.totalorder %s28, 0
      %p49 = por %p47, %p48
      %p50 = scmp.ne.s32.totalorder %s36, %s37
      %p51 = scmp.eq.s32.totalorder %s29, 3
      %p52 = por %p50, %p51
      %p54 = scmp.ne.s32.totalorder %s37, %s53
      %p55 = scmp.eq.s32.totalorder %s29, 0
      %p56 = por %p54, %p55
      %s57 = ssub.s32 %s23, %s30
      %p58 = scmp.eq.s32.totalorder %s57, 0
      %s60 = sadd.s32 %s59, 1
      %s61 = scalar_select %p58, %s59, %s60
      %p64 = pneg %p58
      %p65 = scmp.eq.s32.totalorder %s23, 3
      %p66 = por %p64, %p65
      %p67 = scmp.ne.s32.totalorder %s59, %s62
      %p68 = scmp.eq.s32.totalorder %s23, 0
      %p69 = por %p67, %p68
      %p70 = scmp.ne.s32.totalorder %s59, %s62
      %p71 = scmp.eq.s32.totalorder %s28, 3
      %p72 = por %p70, %p71
      %p73 = scmp.ne.s32.totalorder %s62, %s63
      %p74 = scmp.eq.s32.totalorder %s28, 0
      %p75 = por %p73, %p74
      %p76 = scmp.ne.s32.totalorder %s62, %s63
      %p77 = scmp.eq.s32.totalorder %s29, 3
      %p78 = por %p76, %p77
      %p80 = scmp.ne.s32.totalorder %s63, %s79
      %p81 = scmp.eq.s32.totalorder %s29, 0
      %p82 = por %p80, %p81
      %s83 = ssub.s32 %s23, %s30
      %p84 = scmp.eq.s32.totalorder %s83, 0
      %s86 = sadd.s32 %s85, 1
      %s87 = scalar_select %p84, %s85, %s86
      %p90 = pneg %p84
      %p91 = scmp.eq.s32.totalorder %s23, 3
      %p92 = por %p90, %p91
      %p93 = scmp.ne.s32.totalorder %s85, %s88
      %p94 = scmp.eq.s32.totalorder %s23, 0
      %p95 = por %p93, %p94
      %p96 = scmp.ne.s32.totalorder %s85, %s88
      %p97 = scmp.eq.s32.totalorder %s28, 3
      %p98 = por %p96, %p97
      %p99 = scmp.ne.s32.totalorder %s88, %s89
      %p100 = scmp.eq.s32.totalorder %s28, 0
      %p101 = por %p99, %p100
      %p102 = scmp.ne.s32.totalorder %s88, %s89
      %p103 = scmp.eq.s32.totalorder %s29, 3
      %p104 = por %p102, %p103
      %p106 = scmp.ne.s32.totalorder %s89, %s105
      %p107 = scmp.eq.s32.totalorder %s29, 0
      %p108 = por %p106, %p107
      %s110 = sadd.s32 %s109, 1
      %p113 = scmp.eq.s32.totalorder %s23, 3
      %p114 = scmp.ne.s32.totalorder %s109, %s111
      %p115 = scmp.eq.s32.totalorder %s23, 0
      %p116 = por %p114, %p115
      %p117 = scmp.ne.s32.totalorder %s109, %s111
      %p118 = scmp.eq.s32.totalorder %s28, 3
      %p119 = por %p117, %p118
      %p120 = scmp.ne.s32.totalorder %s111, %s112
      %p121 = scmp.eq.s32.totalorder %s28, 0
      %p122 = por %p120, %p121
      %p123 = scmp.ne.s32.totalorder %s111, %s112
      %p124 = scmp.eq.s32.totalorder %s29, 3
      %p125 = por %p123, %p124
      %p127 = scmp.ne.s32.totalorder %s112, %s126
      %p128 = scmp.eq.s32.totalorder %s29, 0
      %p129 = por %p127, %p128
      %s131 = sadd.s32 %s130, 1
      %p134 = scmp.eq.s32.totalorder %s23, 3
      %p135 = scmp.ne.s32.totalorder %s130, %s132
      %p136 = scmp.eq.s32.totalorder %s23, 0
      %p137 = por %p135, %p136
      %p138 = scmp.ne.s32.totalorder %s130, %s132
      %p139 = scmp.eq.s32.totalorder %s28, 3
      %p140 = por %p138, %p139
      %p141 = scmp.ne.s32.totalorder %s132, %s133
      %p142 = scmp.eq.s32.totalorder %s28, 0
      %p143 = por %p141, %p142
      %p144 = scmp.ne.s32.totalorder %s132, %s133
      %p145 = scmp.eq.s32.totalorder %s29, 3
      %p146 = por %p144, %p145
      %p148 = scmp.ne.s32.totalorder %s133, %s147
      %p149 = scmp.eq.s32.totalorder %s29, 0
      %p150 = por %p148, %p149
      %s152 = sadd.s32 %s151, 1
      %p155 = scmp.eq.s32.totalorder %s23, 3
      %p156 = scmp.ne.s32.totalorder %s151, %s153
      %p157 = scmp.eq.s32.totalorder %s23, 0
      %p158 = por %p156, %p157
      %p159 = scmp.ne.s32.totalorder %s151, %s153
      %p160 = scmp.eq.s32.totalorder %s28, 3
      %p161 = por %p159, %p160
      %p162 = scmp.ne.s32.totalorder %s153, %s154
      %p163 = scmp.eq.s32.totalorder %s28, 0
      %p164 = por %p162, %p163
      %p165 = scmp.ne.s32.totalorder %s153, %s154
      %p166 = scmp.eq.s32.totalorder %s29, 3
      %p167 = por %p165, %p166
      %p169 = scmp.ne.s32.totalorder %s154, %s168
      %p170 = scmp.eq.s32.totalorder %s29, 0
      %p171 = por %p169, %p170
      %s173 = sadd.s32 %s172, 1
      %p176 = scmp.eq.s32.totalorder %s23, 3
      %p177 = scmp.ne.s32.totalorder %s172, %s174
      %p178 = scmp.eq.s32.totalorder %s23, 0
      %p179 = por %p177, %p178
      %p180 = scmp.ne.s32.totalorder %s172, %s174
      %p181 = scmp.eq.s32.totalorder %s28, 3
      %p182 = por %p180, %p181
      %p183 = scmp.ne.s32.totalorder %s174, %s175
      %p184 = scmp.eq.s32.totalorder %s28, 0
      %p185 = por %p183, %p184
      %p186 = scmp.ne.s32.totalorder %s174, %s175
      %p187 = scmp.eq.s32.totalorder %s29, 3
      %p188 = por %p186, %p187
      %p190 = scmp.ne.s32.totalorder %s175, %s189
      %p191 = scmp.eq.s32.totalorder %s29, 0
      %p192 = por %p190, %p191
      %s193 = ssub.s32 %s23, %s30
      %p194 = scmp.eq.s32.totalorder %s193, 0
      %s196 = sadd.s32 %s195, 1
      %s197 = scalar_select %p194, %s195, %s196
      %p200 = pneg %p194
      %p201 = scmp.eq.s32.totalorder %s23, 3
      %p202 = por %p200, %p201
      %p203 = scmp.ne.s32.totalorder %s195, %s198
      %p204 = scmp.eq.s32.totalorder %s23, 0
      %p205 = por %p203, %p204
      %p206 = scmp.ne.s32.totalorder %s195, %s198
      %p207 = scmp.eq.s32.totalorder %s28, 3
      %p208 = por %p206, %p207
      %p209 = scmp.ne.s32.totalorder %s198, %s199
      %p210 = scmp.eq.s32.totalorder %s28, 0
      %p211 = por %p209, %p210
      %p212 = scmp.ne.s32.totalorder %s198, %s199
      %p213 = scmp.eq.s32.totalorder %s29, 3
      %p214 = por %p212, %p213
      %p216 = scmp.ne.s32.totalorder %s199, %s215
      %p217 = scmp.eq.s32.totalorder %s29, 0
      %p218 = por %p216, %p217
      %p219 = scmp.le.s32.totalorder 1, %s23
      %p220 = scmp.lt.s32.totalorder %s23, 5
      %p221 = pnand %p219, %p220
      %p222 = pneg %p221
      // Predicated region
      $region9: #{tpu_custom_call.1} parent=5 // pred_check
        _
      $region10: #{tpu_custom_call.1} parent=5 // pred_check_branch
        %224 = sbr.rel (%p221) target = $region12
      $region11: #{tpu_custom_call.1} parent=5 // pred_region
        %s225 = ssub.s32 %s23, 1
        // Predicated region
        $region13: #{tpu_custom_call.1} parent=11 // pred_check
          %p226 = pneg %p122
        $region14: #{tpu_custom_call.1} parent=11 // pred_check_branch
          %228 = sbr.rel (%p226) target = $region16
        $region15: #{tpu_custom_call.1} parent=11 // pred_region
          %s230 = ssub.s32 256, 256
          %231 = vsyncadd [#allocation9], %s230
          %s232 = sshll.u32 [#allocation8], 4
          %s233 = int_to_ptr.vmem [resolvable:$true] %s232
          %238 = dma.hbm_to_vmem [thread:$0]  %s3, 256, %s233, [#allocation9], 64, 64, 4
        $region16: #{tpu_custom_call.1} parent=11 // pred_fallthru
          _
        // Predicated region
        $region17: #{tpu_custom_call.1} parent=11 // pred_check
          %p239 = pneg %p143
        $region18: #{tpu_custom_call.1} parent=11 // pred_check_branch
          %241 = sbr.rel (%p239) target = $region20
        $region19: #{tpu_custom_call.1} parent=11 // pred_region
          %s243 = ssub.s32 256, 256
          %244 = vsyncadd [#allocation9], %s243
          %s245 = sshll.u32 [#allocation10], 4
          %s246 = int_to_ptr.vmem [resolvable:$true] %s245
          %251 = dma.hbm_to_vmem [thread:$0]  %s4, 256, %s246, [#allocation9], 64, 64, 4
        $region20: #{tpu_custom_call.1} parent=11 // pred_fallthru
          _
        // Predicated region
        $region21: #{tpu_custom_call.1} parent=11 // pred_check
          %p252 = pneg %p164
        $region22: #{tpu_custom_call.1} parent=11 // pred_check_branch
          %254 = sbr.rel (%p252) target = $region24
        $region23: #{tpu_custom_call.1} parent=11 // pred_region
          _
        $region24: #{tpu_custom_call.1} parent=11 // pred_fallthru
          _
        // Predicated region
        $region25: #{tpu_custom_call.1} parent=11 // pred_check
          %p255 = pneg %p185
        $region26: #{tpu_custom_call.1} parent=11 // pred_check_branch
          %257 = sbr.rel (%p255) target = $region28
        $region27: #{tpu_custom_call.1} parent=11 // pred_region
          _
        $region28: #{tpu_custom_call.1} parent=11 // pred_fallthru
          _
      $region12: #{tpu_custom_call.1} parent=5 // pred_fallthru
        _
      %p258 = scmp.lt.s32.totalorder %s23, 4
      // Predicated region
      $region29: #{tpu_custom_call.1} parent=5 // pred_check
        %p259 = pneg %p258
      $region30: #{tpu_custom_call.1} parent=5 // pred_check_branch
        %261 = sbr.rel (%p259) target = $region32
      $region31: #{tpu_custom_call.1} parent=5 // pred_region
        // Predicated region
        $region33: #{tpu_custom_call.1} parent=31 // pred_check
          %p262 = pneg %p43
        $region34: #{tpu_custom_call.1} parent=31 // pred_check_branch
          %264 = sbr.rel (%p262) target = $region36
        $region35: #{tpu_custom_call.1} parent=31 // pred_region
          %s265 = sand.u32 %s33, 1
          %s266 = scalar_lea.sflag [#allocation3], %s265
          %s267 = sand.u32 %s33, 1
          %s268 = smul.addr %s267, 32
          %s269 = scalar_lea.vmem [#allocation2], %s268
          %s270 = smul.u32 8, %s23
          %s272 = ssub.s32 512, 512
          %273 = vsyncadd %s266, %s272
          %s274 = smul.addr %s270, 64
          %s275 = scalar_lea.hbm %s0, %s274
          %s276 = sshll.u32 %s269, 4
          %s277 = int_to_ptr.vmem [resolvable:$true] %s276
          %282 = dma.hbm_to_vmem [thread:$0]  %s275, 512, %s277, %s266, 64, 64, 4
        $region36: #{tpu_custom_call.1} parent=31 // pred_fallthru
          _
        // Predicated region
        $region37: #{tpu_custom_call.1} parent=31 // pred_check
          %p283 = pneg %p69
        $region38: #{tpu_custom_call.1} parent=31 // pred_check_branch
          %285 = sbr.rel (%p283) target = $region40
        $region39: #{tpu_custom_call.1} parent=31 // pred_region
          %s286 = sand.u32 %s23, 1
          %s287 = scalar_lea.sflag [#allocation6], %s286
          %s288 = sand.u32 %s59, 1
          %s289 = smul.addr %s288, 4
          %s290 = scalar_lea.vmem [#allocation5], %s289
          %s292 = ssub.s32 64, 64
          %293 = vsyncadd %s287, %s292
          %s294 = smul.addr %s23, 64
          %s295 = scalar_lea.hbm %s1, %s294
          %s297 = sshll.u32 %s290, 4
          %s298 = int_to_ptr.vmem [resolvable:$true] %s297
          %300 = dma.hbm_to_vmem [thread:$0]  %s295, 64, %s298, %s287
        $region40: #{tpu_custom_call.1} parent=31 // pred_fallthru
          _
        // Predicated region
        $region41: #{tpu_custom_call.1} parent=31 // pred_check
          %p301 = pneg %p95
        $region42: #{tpu_custom_call.1} parent=31 // pred_check_branch
          %303 = sbr.rel (%p301) target = $region44
        $region43: #{tpu_custom_call.1} parent=31 // pred_region
          %s304 = sand.u32 %s23, 1
          %s305 = scalar_lea.sflag [#allocation6], %s304
          %s306 = sand.u32 %s85, 1
          %s307 = smul.addr %s306, 4
          %s308 = scalar_lea.vmem [#allocation7], %s307
          %s310 = ssub.s32 64, 64
          %311 = vsyncadd %s305, %s310
          %s312 = smul.addr %s23, 64
          %s313 = scalar_lea.hbm %s2, %s312
          %s315 = sshll.u32 %s308, 4
          %s316 = int_to_ptr.vmem [resolvable:$true] %s315
          %318 = dma.hbm_to_vmem [thread:$0]  %s313, 64, %s316, %s305
        $region44: #{tpu_custom_call.1} parent=31 // pred_fallthru
          _
      $region32: #{tpu_custom_call.1} parent=5 // pred_fallthru
        _
      %p319 = scmp.le.s32.totalorder 1, %s23
      %p320 = scmp.lt.s32.totalorder %s23, 5
      %p321 = pnand %p319, %p320
      %p322 = pneg %p321
      // Predicated region
      $region45: #{tpu_custom_call.1} parent=5 // pred_check
        _
      $region46: #{tpu_custom_call.1} parent=5 // pred_check_branch
        %324 = sbr.rel (%p321) target = $region48
      $region47: #{tpu_custom_call.1} parent=5 // pred_region
        %s325 = ssub.s32 %s23, 1
        %s326 = sand.u32 %s36, 1
        %s327 = scalar_lea.sflag [#allocation3], %s326
        %s328 = sand.u32 %s36, 1
        %s329 = smul.addr %s328, 32
        %s330 = scalar_lea.vmem [#allocation2], %s329
        // Predicated region
        $region49: #{tpu_custom_call.1} parent=47 // pred_check
          %p331 = pneg %p49
        $region50: #{tpu_custom_call.1} parent=47 // pred_check_branch
          %333 = sbr.rel (%p331) target = $region52
        $region51: #{tpu_custom_call.1} parent=47 // pred_region
          %334 = dma.done %s327, 512
        $region52: #{tpu_custom_call.1} parent=47 // pred_fallthru
          _
        %s335 = sand.u32 %s28, 1
        %s336 = scalar_lea.sflag [#allocation6], %s335
        %s337 = sand.u32 %s62, 1
        %s338 = smul.addr %s337, 4
        %s339 = scalar_lea.vmem [#allocation5], %s338
        // Predicated region
        $region53: #{tpu_custom_call.1} parent=47 // pred_check
          %p340 = pneg %p75
        $region54: #{tpu_custom_call.1} parent=47 // pred_check_branch
          %342 = sbr.rel (%p340) target = $region56
        $region55: #{tpu_custom_call.1} parent=47 // pred_region
          %343 = dma.done %s336, 64
        $region56: #{tpu_custom_call.1} parent=47 // pred_fallthru
          _
        %s344 = sand.u32 %s28, 1
        %s345 = scalar_lea.sflag [#allocation6], %s344
        %s346 = sand.u32 %s88, 1
        %s347 = smul.addr %s346, 4
        %s348 = scalar_lea.vmem [#allocation7], %s347
        // Predicated region
        $region57: #{tpu_custom_call.1} parent=47 // pred_check
          %p349 = pneg %p101
        $region58: #{tpu_custom_call.1} parent=47 // pred_check_branch
          %351 = sbr.rel (%p349) target = $region60
        $region59: #{tpu_custom_call.1} parent=47 // pred_region
          %352 = dma.done %s345, 64
        $region60: #{tpu_custom_call.1} parent=47 // pred_fallthru
          _
        // Predicated region
        $region61: #{tpu_custom_call.1} parent=47 // pred_check
          %p353 = pneg %p122
        $region62: #{tpu_custom_call.1} parent=47 // pred_check_branch
          %355 = sbr.rel (%p353) target = $region64
        $region63: #{tpu_custom_call.1} parent=47 // pred_region
          %356 = dma.done [#allocation9], 256
        $region64: #{tpu_custom_call.1} parent=47 // pred_fallthru
          _
        // Predicated region
        $region65: #{tpu_custom_call.1} parent=47 // pred_check
          %p357 = pneg %p143
        $region66: #{tpu_custom_call.1} parent=47 // pred_check_branch
          %359 = sbr.rel (%p357) target = $region68
        $region67: #{tpu_custom_call.1} parent=47 // pred_region
          %360 = dma.done [#allocation9], 256
        $region68: #{tpu_custom_call.1} parent=47 // pred_fallthru
          _
        %s361 = sand.u32 %s36, 1
        %s362 = scalar_lea.sflag [#allocation3], %s361
        %s363 = sand.u32 %s36, 1
        %s364 = smul.addr %s363, 32
        %s365 = scalar_lea.vmem [#allocation2], %s364
        %p366 = pneg %p49
        %p367 = pneg %p46
        %s368 = sand.u32 %s28, 1
        %s369 = scalar_lea.sflag [#allocation6], %s368
        %s370 = sand.u32 %s62, 1
        %s371 = smul.addr %s370, 4
        %s372 = scalar_lea.vmem [#allocation5], %s371
        %p373 = pneg %p75
        %p374 = pneg %p72
        %s375 = sand.u32 %s28, 1
        %s376 = scalar_lea.sflag [#allocation6], %s375
        %s377 = sand.u32 %s88, 1
        %s378 = smul.addr %s377, 4
        %s379 = scalar_lea.vmem [#allocation7], %s378
        %p380 = pneg %p101
        %p381 = pneg %p98
        %p382 = pneg %p122
        %p383 = pneg %p119
        %p384 = pneg %p143
        %p385 = pneg %p140
        %p386 = pneg %p164
        %p387 = pneg %p161
        %p388 = pneg %p185
        %p389 = pneg %p182
        %p390 = pneg %p211
        %p391 = pneg %p208
        %s392 = sand.u32 %s198, 1
        %s393 = scalar_lea.sflag [#allocation4], %s392
        %s394 = sand.u32 %s198, 1
        %s395 = smul.addr %s394, 8
        %s396 = scalar_lea.vmem [#allocation11], %s395
        %s397 = smul.u32 8, %s28
        %v399 = vld [vmem:[%s330] sm:$0xf]
        %v400 = vld [vmem:[%s330 + $0x4] sm:$0xf]
        %v401 = vld [vmem:[%s330 + $0x8] sm:$0xf]
        %v402 = vld [vmem:[%s330 + $0xc] sm:$0xf]
        %v403 = vld [vmem:[%s330 + $0x10] sm:$0xf]
        %v404 = vld [vmem:[%s330 + $0x14] sm:$0xf]
        %v405 = vld [vmem:[%s330 + $0x18] sm:$0xf]
        %v406 = vld [vmem:[%s330 + $0x1c] sm:$0xf]
        %v407 = vunpack.c.l.bf16 %v399
        %v408 = vunpack.c.l.bf16 %v400
        %v409 = vunpack.c.l.bf16 %v401
        %v410 = vunpack.c.l.bf16 %v402
        %v411 = vunpack.c.l.bf16 %v403
        %v412 = vunpack.c.l.bf16 %v404
        %v413 = vunpack.c.l.bf16 %v405
        %v414 = vunpack.c.l.bf16 %v406
        %vm415 = vcmask 261120
        %v416 = vsel %vm415, %v407, 0.0
        %v417 = vrot.slane %v416, 4
        %v418 = vadd.f32 %v416, %v417
        %v419 = vrot.slane %v418, 2
        %v420 = vadd.f32 %v418, %v419
        %v421 = vrot.slane %v420, 1
        %v422 = vadd.f32 %v420, %v421
        %v423 = vsel %vm415, %v408, 0.0
        %v424 = vrot.slane %v423, 4
        %v425 = vadd.f32 %v423, %v424
        %v426 = vrot.slane %v425, 2
        %v427 = vadd.f32 %v425, %v426
        %v428 = vrot.slane %v427, 1
        %v429 = vadd.f32 %v427, %v428
        %v430 = vsel %vm415, %v409, 0.0
        %v431 = vrot.slane %v430, 4
        %v432 = vadd.f32 %v430, %v431
        %v433 = vrot.slane %v432, 2
        %v434 = vadd.f32 %v432, %v433
        %v435 = vrot.slane %v434, 1
        %v436 = vadd.f32 %v434, %v435
        %v437 = vsel %vm415, %v410, 0.0
        %v438 = vrot.slane %v437, 4
        %v439 = vadd.f32 %v437, %v438
        %v440 = vrot.slane %v439, 2
        %v441 = vadd.f32 %v439, %v440
        %v442 = vrot.slane %v441, 1
        %v443 = vadd.f32 %v441, %v442
        %v444 = vsel %vm415, %v411, 0.0
        %v445 = vrot.slane %v444, 4
        %v446 = vadd.f32 %v444, %v445
        %v447 = vrot.slane %v446, 2
        %v448 = vadd.f32 %v446, %v447
        %v449 = vrot.slane %v448, 1
        %v450 = vadd.f32 %v448, %v449
        %v451 = vsel %vm415, %v412, 0.0
        %v452 = vrot.slane %v451, 4
        %v453 = vadd.f32 %v451, %v452
        %v454 = vrot.slane %v453, 2
        %v455 = vadd.f32 %v453, %v454
        %v456 = vrot.slane %v455, 1
        %v457 = vadd.f32 %v455, %v456
        %v458 = vsel %vm415, %v413, 0.0
        %v459 = vrot.slane %v458, 4
        %v460 = vadd.f32 %v458, %v459
        %v461 = vrot.slane %v460, 2
        %v462 = vadd.f32 %v460, %v461
        %v463 = vrot.slane %v462, 1
        %v464 = vadd.f32 %v462, %v463
        %v465 = vsel %vm415, %v414, 0.0
        %v466 = vrot.slane %v465, 4
        %v467 = vadd.f32 %v465, %v466
        %v468 = vrot.slane %v467, 2
        %v469 = vadd.f32 %v467, %v468
        %v470 = vrot.slane %v469, 1
        %v471 = vadd.f32 %v469, %v470
        %v472 = vpack.c.bf16 %v422, %v422
        %v473 = vpack.c.bf16 %v429, %v429
        %v474 = vpack.c.bf16 %v436, %v436
        %v475 = vpack.c.bf16 %v443, %v443
        %v476 = vpack.c.bf16 %v450, %v450
        %v477 = vpack.c.bf16 %v457, %v457
        %v478 = vpack.c.bf16 %v464, %v464
        %v479 = vpack.c.bf16 %v471, %v471
        %v480 = vld [vmem:[#allocation8] sm:$0xf]
        %v481 = vld [vmem:[#allocation8 + $0x4] sm:$0xf]
        %v482 = vld [vmem:[#allocation8 + $0x8] sm:$0xf]
        %v483 = vld [vmem:[#allocation8 + $0xc] sm:$0xf]
        %v484 = vld [vmem:[%s339] sm:$0xf]
        %v485 = vld [vmem:[#allocation10] sm:$0xf]
        %v486 = vld [vmem:[#allocation10 + $0x4] sm:$0xf]
        %v487 = vld [vmem:[#allocation10 + $0x8] sm:$0xf]
        %v488 = vld [vmem:[#allocation10 + $0xc] sm:$0xf]
        %v493 = vunpack.c.l.b16 %v485
        %v494 = vunpack.c.l.b16 %v486
        %v495 = vunpack.c.l.b16 %v487
        %v496 = vunpack.c.l.b16 %v488
        %v497 = vpack.c.b16 %v494, %v493
        %v498 = vpack.c.b16 %v496, %v495
        %v502 = vsel %vm415, %v484, 0
        %504 = vmatprep.subr.bf16.mxu0 0
        %505 = vmatpush1.bf16.msra.mxu0 %v497
        %506 = vmatprep.subr.bf16.mxu0 0
        %507 = vmatpush1.bf16.msra.mxu0 %v498
        %508 = vmatprep.subr.bf16.mxu0 0
        %509 = vmatpush1.bf16.msra.mxu0 0
        %510 = vmatprep.subr.bf16.mxu0 0
        %511 = vmatpush1.bf16.msra.mxu0 0
        %512 = vmatprep.subr.bf16.mxu0 0
        %513 = vmatpush1.bf16.msra.mxu0 0
        %514 = vmatprep.subr.bf16.mxu0 0
        %515 = vmatpush1.bf16.msra.mxu0 0
        %516 = vmatprep.subr.bf16.mxu0 0
        %517 = vmatpush1.bf16.msra.mxu0 0
        %518 = vmatprep.subr.bf16.mxu0 0
        %519 = vmatpush1.bf16.msra.mxu0 0
        %520 = vmatprep.subr.bf16.mxu0 0
        %521 = vmatpush1.bf16.msra.mxu0 0
        %522 = vmatprep.subr.bf16.mxu0 0
        %523 = vmatpush1.bf16.msra.mxu0 0
        %524 = vmatprep.subr.bf16.mxu0 0
        %525 = vmatpush1.bf16.msra.mxu0 0
        %526 = vmatprep.subr.bf16.mxu0 0
        %527 = vmatpush1.bf16.msra.mxu0 0
        %528 = vmatprep.subr.bf16.mxu0 0
        %529 = vmatpush1.bf16.msra.mxu0 0
        %530 = vmatprep.subr.bf16.mxu0 0
        %531 = vmatpush1.bf16.msra.mxu0 0
        %532 = vmatprep.subr.bf16.mxu0 0
        %533 = vmatpush1.bf16.msra.mxu0 0
        %534 = vmatprep.subr.bf16.mxu0 0
        %535 = vmatpush1.bf16.msra.mxu0 0
        %536 = vmatprep.mubr.bf16.mxu0 0
        %537 = vmatmul.mubr.bf16.gmra.mrb[0].mxu0 %v502
        %v538 = vpop.f32.mrb[0].mxu0
        %v539 = vadd.f32 0.0, %v538
        %v540 = vpop.f32.mrb[0].mxu0
        %v541 = vpop.f32.mrb[0].mxu0
        %v542 = vpop.f32.mrb[0].mxu0
        %543 = vdwg.mxu0
        %v552 = vunpack.c.l.b16 %v472
        %v553 = vunpack.c.l.b16 %v473
        %v554 = vunpack.c.l.b16 %v474
        %v555 = vunpack.c.l.b16 %v475
        %v556 = vunpack.c.l.b16 %v476
        %v557 = vunpack.c.l.b16 %v477
        %v558 = vunpack.c.l.b16 %v478
        %v559 = vunpack.c.l.b16 %v479
        %vm560 = vcmask 1041409
        %v561 = vsel %vm560, %v553, %v552
        %vm562 = vcmask 1042434
        %v563 = vsel %vm562, %v554, %v561
        %vm564 = vcmask 1043459
        %v565 = vsel %vm564, %v555, %v563
        %vm566 = vcmask 1044484
        %v567 = vsel %vm566, %v556, %v565
        %vm568 = vcmask 1045509
        %v569 = vsel %vm568, %v557, %v567
        %vm570 = vcmask 1046534
        %v571 = vsel %vm570, %v558, %v569
        %vm572 = vcmask 1047559
        %v573 = vsel %vm572, %v559, %v571
        %v574 = vpack.c.b16 %v573, %v573
        %v579 = vunpack.c.l.b16 %v480
        %v580 = vunpack.c.l.b16 %v481
        %v581 = vunpack.c.l.b16 %v482
        %v582 = vunpack.c.l.b16 %v483
        %v583 = vpack.c.b16 %v580, %v579
        %v584 = vpack.c.b16 %v582, %v581
        %v588 = vsel %vm415, %v574, 0
        %590 = vmatprep.subr.bf16.mxu0 0
        %591 = vmatpush1.bf16.msra.mxu0 %v583
        %592 = vmatprep.subr.bf16.mxu0 0
        %593 = vmatpush1.bf16.msra.mxu0 %v584
        %594 = vmatprep.subr.bf16.mxu0 0
        %595 = vmatpush1.bf16.msra.mxu0 0
        %596 = vmatprep.subr.bf16.mxu0 0
        %597 = vmatpush1.bf16.msra.mxu0 0
        %598 = vmatprep.subr.bf16.mxu0 0
        %599 = vmatpush1.bf16.msra.mxu0 0
        %600 = vmatprep.subr.bf16.mxu0 0
        %601 = vmatpush1.bf16.msra.mxu0 0
        %602 = vmatprep.subr.bf16.mxu0 0
        %603 = vmatpush1.bf16.msra.mxu0 0
        %604 = vmatprep.subr.bf16.mxu0 0
        %605 = vmatpush1.bf16.msra.mxu0 0
        %606 = vmatprep.subr.bf16.mxu0 0
        %607 = vmatpush1.bf16.msra.mxu0 0
        %608 = vmatprep.subr.bf16.mxu0 0
        %609 = vmatpush1.bf16.msra.mxu0 0
        %610 = vmatprep.subr.bf16.mxu0 0
        %611 = vmatpush1.bf16.msra.mxu0 0
        %612 = vmatprep.subr.bf16.mxu0 0
        %613 = vmatpush1.bf16.msra.mxu0 0
        %614 = vmatprep.subr.bf16.mxu0 0
        %615 = vmatpush1.bf16.msra.mxu0 0
        %616 = vmatprep.subr.bf16.mxu0 0
        %617 = vmatpush1.bf16.msra.mxu0 0
        %618 = vmatprep.subr.bf16.mxu0 0
        %619 = vmatpush1.bf16.msra.mxu0 0
        %620 = vmatprep.subr.bf16.mxu0 0
        %621 = vmatpush1.bf16.msra.mxu0 0
        %622 = vmatprep.mubr.bf16.mxu0 0
        %623 = vmatmul.mubr.bf16.gmra.mrb[0].mxu0 %v588
        %v624 = vpop.f32.mrb[0].mxu0
        %v625 = vadd.f32 %v539, %v624
        %v626 = vpop.f32.mrb[0].mxu0
        %v627 = vpop.f32.mrb[0].mxu0
        %v628 = vpop.f32.mrb[0].mxu0
        %629 = vdwg.mxu0
        %v630 = vld [vmem:[%s348] sm:$0xf]
        %v631 = vld [vmem:[%s5] sm:$0xf]
        %v632 = vld [vmem:[%s5 + $0x4] sm:$0xf]
        %v633 = vld [vmem:[%s5 + $0x8] sm:$0xf]
        %v634 = vld [vmem:[%s5 + $0xc] sm:$0xf]
        %v639 = vunpack.c.l.b16 %v631
        %v640 = vunpack.c.l.b16 %v632
        %v641 = vunpack.c.l.b16 %v633
        %v642 = vunpack.c.l.b16 %v634
        %v643 = vpack.c.b16 %v640, %v639
        %v644 = vpack.c.b16 %v642, %v641
        %v648 = vsel %vm415, %v630, 0
        %650 = vmatprep.subr.bf16.mxu0 0
        %651 = vmatpush1.bf16.msra.mxu0 %v643
        %652 = vmatprep.subr.bf16.mxu0 0
        %653 = vmatpush1.bf16.msra.mxu0 %v644
        %654 = vmatprep.subr.bf16.mxu0 0
        %655 = vmatpush1.bf16.msra.mxu0 0
        %656 = vmatprep.subr.bf16.mxu0 0
        %657 = vmatpush1.bf16.msra.mxu0 0
        %658 = vmatprep.subr.bf16.mxu0 0
        %659 = vmatpush1.bf16.msra.mxu0 0
        %660 = vmatprep.subr.bf16.mxu0 0
        %661 = vmatpush1.bf16.msra.mxu0 0
        %662 = vmatprep.subr.bf16.mxu0 0
        %663 = vmatpush1.bf16.msra.mxu0 0
        %664 = vmatprep.subr.bf16.mxu0 0
        %665 = vmatpush1.bf16.msra.mxu0 0
        %666 = vmatprep.subr.bf16.mxu0 0
        %667 = vmatpush1.bf16.msra.mxu0 0
        %668 = vmatprep.subr.bf16.mxu0 0
        %669 = vmatpush1.bf16.msra.mxu0 0
        %670 = vmatprep.subr.bf16.mxu0 0
        %671 = vmatpush1.bf16.msra.mxu0 0
        %672 = vmatprep.subr.bf16.mxu0 0
        %673 = vmatpush1.bf16.msra.mxu0 0
        %674 = vmatprep.subr.bf16.mxu0 0
        %675 = vmatpush1.bf16.msra.mxu0 0
        %676 = vmatprep.subr.bf16.mxu0 0
        %677 = vmatpush1.bf16.msra.mxu0 0
        %678 = vmatprep.subr.bf16.mxu0 0
        %679 = vmatpush1.bf16.msra.mxu0 0
        %680 = vmatprep.subr.bf16.mxu0 0
        %681 = vmatpush1.bf16.msra.mxu0 0
        %682 = vmatprep.mubr.bf16.mxu0 0
        %683 = vmatmul.mubr.bf16.gmra.mrb[0].mxu0 %v648
        %v684 = vpop.f32.mrb[0].mxu0
        %v685 = vadd.f32 0.0, %v684
        %v686 = vpop.f32.mrb[0].mxu0
        %v687 = vpop.f32.mrb[0].mxu0
        %v688 = vpop.f32.mrb[0].mxu0
        %689 = vdwg.mxu0
        %v690 = vadd.f32 %v625, %v685
        %v691 = vld [vmem:[%s6] sm:$0x1]
        %v693 = vlaneseq
        %v694 = vshrl.u32 %v693, 7
        %v695 = vsub.s32 0, %v694
        %v696 = vrot.slane %v691, %v695
        %v698 = vadd.f32 %v690, %v696
        %699 = vst.msk [vmem:[%s396] sm:$0xff] %vm415, %v698
        %s700 = sand.u32 %s198, 1
        %s701 = scalar_lea.sflag [#allocation4], %s700
        %s702 = sand.u32 %s198, 1
        %s703 = smul.addr %s702, 8
        %s704 = scalar_lea.vmem [#allocation11], %s703
        // Predicated region
        $region69: #{tpu_custom_call.1} parent=47 // pred_check
          %p705 = pneg %p208
        $region70: #{tpu_custom_call.1} parent=47 // pred_check_branch
          %707 = sbr.rel (%p705) target = $region72
        $region71: #{tpu_custom_call.1} parent=47 // pred_region
          %s709 = ssub.s32 128, 128
          %710 = vsyncadd %s701, %s709
          %s711 = smul.addr %s28, 128
          %s712 = scalar_lea.hbm %s7, %s711
          %s714 = sshll.u32 %s704, 4
          %s715 = int_to_ptr.vmem [resolvable:$true] %s714
          %717 = dma.vmem_to_hbm [thread:$0]  %s715, 128, %s712, %s701
        $region72: #{tpu_custom_call.1} parent=47 // pred_fallthru
          _
      $region48: #{tpu_custom_call.1} parent=5 // pred_fallthru
        _
      %p718 = scmp.le.s32.totalorder 2, %s23
      // Predicated region
      $region73: #{tpu_custom_call.1} parent=5 // pred_check
        %p719 = pneg %p718
      $region74: #{tpu_custom_call.1} parent=5 // pred_check_branch
        %721 = sbr.rel (%p719) target = $region76
      $region75: #{tpu_custom_call.1} parent=5 // pred_region
        %s722 = ssub.s32 %s23, 2
        // Predicated region
        $region77: #{tpu_custom_call.1} parent=75 // pred_check
          %p723 = pneg %p214
        $region78: #{tpu_custom_call.1} parent=75 // pred_check_branch
          %725 = sbr.rel (%p723) target = $region80
        $region79: #{tpu_custom_call.1} parent=75 // pred_region
          %s726 = sand.u32 %s199, 1
          %s727 = scalar_lea.sflag [#allocation4], %s726
          %s728 = sand.u32 %s199, 1
          %s729 = smul.addr %s728, 8
          %s730 = scalar_lea.vmem [#allocation11], %s729
          %731 = dma.done %s727, 128
        $region80: #{tpu_custom_call.1} parent=75 // pred_fallthru
          _
      $region76: #{tpu_custom_call.1} parent=5 // pred_fallthru
        _
    $region6: #{tpu_custom_call.1} parent=1 // loop_footer
      %s27 = sadd.s32 1, %s23
    $region7: #{tpu_custom_call.1} parent=1 // loop_footer_branch
      %22 = sbr.rel target = $region3
    $region8: #{tpu_custom_call.1} parent=1 // loop_exit
      _
    %732 = vsyncpa [#allocation3], 1
    %s733 = scalar_lea.sflag [#allocation3], 1
    %734 = vsyncpa %s733, 1
    %735 = vsyncpa [#allocation6], 1
    %s736 = scalar_lea.sflag [#allocation6], 1
    %737 = vsyncpa %s736, 1
    %738 = vsyncpa [#allocation9], 1
    %739 = vsyncpa [#allocation4], 1
    %s740 = scalar_lea.sflag [#allocation4], 1
    %741 = vsyncpa %s740, 1

</llo_original>
